<compile_context>
chip_gen: v7x
topology: tpu7x:2x2x1
jax: 0.10.0
libtpu: 0.0.40
codegen_flags: <defaults>
</compile_context>

<pallas_src>
import jax
import jax.numpy as jnp
from jax.experimental import pallas as pl
from jax.experimental.pallas import tpu as pltpu


def _attention_kernel(hproj_ref, enc_ref, w1a_ref, w4_ref, b4_ref, wt_ref,
                      out_ref):
    bt, s, h = enc_ref.shape
    cdt = w1a_ref.dtype                               # MXU operand dtype (bf16 default)

    enc = enc_ref[...]                                # (bt, s, h)

    # linear1, encoder half only; hidden half + bias were hoisted (hproj, f32).
    x = jnp.dot(enc.reshape(bt * s, h).astype(cdt), w1a_ref[...],
                preferred_element_type=jnp.float32)               # (bt*s, 3h) f32
    x = x.reshape(bt, s, 3 * h) + hproj_ref[...][:, None, :]      # + (bt, 1, 3h)

    # linear4 (3H -> H).
    # TODO(synk): tile this 3H contraction into <=256-wide chunks (f32 VMEM
    # accumulator) once H >= ~512 to cap vreg/VMEM pressure.
    x = jnp.dot(x.reshape(bt * s, 3 * h).astype(cdt), w4_ref[...],
                preferred_element_type=jnp.float32)               # (bt*s, h) f32
    x = (x + b4_ref[...]).reshape(bt, s, h)

    # to_weight (H -> 1, no bias): VPU multiply + lane reduce (no N=1 MXU matmul).
    logits = jnp.sum(x * wt_ref[...], axis=-1, keepdims=True)     # (bt, s, 1)

    # softmax over the sequence axis, per batch row.
    m = jnp.max(logits, axis=1, keepdims=True)                    # (bt, 1, 1)
    e = jnp.exp(logits - m)
    denom = jnp.sum(e, axis=1, keepdims=True)
    r = pl.reciprocal(denom, approx=True)                         # EUP slot
    r = r * (2.0 - denom * r)                                     # one Newton step (VPU)
    wsm = e * r                                                   # (bt, s, 1)

    # context = attention_weights @ enc  -> (bt, h), f32 reduction over s.
    ctx = jnp.sum(wsm * enc.astype(jnp.float32), axis=1)
    out_ref[...] = ctx.astype(out_ref.dtype)


def _tpu_chip_info():
    """(tensorcores_per_chip, mxu_row_target, vmem_capacity_bytes) best-effort."""
    kind = ""
    try:
        kind = jax.devices()[0].device_kind.lower()
    except Exception:
        pass
    if "v7" in kind or "7x" in kind:
        cores, rows, vmem = 2, 256, 64 << 20
    elif "v6" in kind:
        cores, rows, vmem = 1, 256, 128 << 20
    elif "v5p" in kind or "v4" in kind:
        cores, rows, vmem = 2, 128, 128 << 20
    else:                               # v5e / unknown: conservative
        cores, rows, vmem = 1, 128, 128 << 20
    try:                                # prefer the real number when available
        vmem = int(pltpu.get_tpu_info().vmem_capacity_bytes)
    except Exception:
        pass
    return cores, rows, vmem


def _pick_batch_tile(B, S, *, num_cores, target_rows):
    """Batch rows per grid step."""
    bt = max(1, pl.cdiv(target_rows, max(S, 1)))      # fill ~target_rows MXU rows
    if bt >= 8:
        bt = (bt // 8) * 8                            # sublane-dense (bt, H) stores
    bt = min(bt, B if B < 8 else pl.cdiv(B, 8) * 8)
    if num_cores > 1 and B >= num_cores:              # leave work for every TC
        bt = min(bt, pl.cdiv(B, num_cores))
    return max(int(bt), 1)


def _vmem_limit_bytes(bt, S, H, enc_itemsize, cdt_itemsize, single_buffer_weights,
                      vmem_cap):
    wbuf = 1 if single_buffer_weights else 2
    weights = wbuf * ((H * 3 * H + 3 * H * H) * cdt_itemsize + 3 * H * 4 + 2 * H * 4)
    streamed = 2 * (bt * 3 * H * 4                    # hproj (f32, double-buffered)
                    + bt * S * H * enc_itemsize       # encoder tile
                    + bt * H * enc_itemsize)          # output tile
    live = 3 * bt * S * 3 * H * 4                     # generous f32 intermediates
    need = weights + streamed + live + (4 << 20)
    return int(min(max(32 << 20, need), int(vmem_cap * 0.9)))


def attention_forward(hidden_state, encoder_outputs, params, *,
                      compute_dtype=jnp.bfloat16, block_b=None,
                      single_buffer_weights=True):
    """hidden_state: (B, H), encoder_outputs: (B, S, H) -> context: (B, H)."""
    B, S, H = encoder_outputs.shape
    out_dtype = encoder_outputs.dtype
    cdt = jnp.dtype(compute_dtype if compute_dtype is not None
                    else encoder_outputs.dtype)

    w1t, b1 = params["w1t"], params["b1"]
    w4t, b4 = params["w4t"], params["b4"]
    wtt = params["wtt"]

    # Hoisted hidden projection (f32): hidden half of the concat-matmul + linear1
    # bias, computed once as a (B,H)x(H,3H) matmul.  Kept 2D (sublane-dense).
    hproj = (hidden_state.astype(jnp.float32) @ w1t[H:, :].astype(jnp.float32)
             + b1.astype(jnp.float32).reshape(1, 3 * H))          # (B, 3H)

    w1a = w1t[:H, :].astype(cdt)                                  # (H, 3H)  MXU operand
    w4 = w4t.astype(cdt)                                          # (3H, H)  MXU operand
    b4r = b4.astype(jnp.float32).reshape(1, H)                    # (1, H)   f32
    wt3 = wtt.astype(jnp.float32).reshape(1, 1, H)                # (1, 1, H) f32

    num_cores, target_rows, vmem_cap = _tpu_chip_info()
    if block_b is not None:
        bt = max(1, min(block_b, B))
    else:
        bt = _pick_batch_tile(B, S, num_cores=num_cores, target_rows=target_rows)
    nb = pl.cdiv(B, bt)
    b_pad = nb * bt

    enc = encoder_outputs
    if b_pad != B:
        # Padded batch rows are computed independently and sliced off below.
        enc = jnp.pad(enc, ((0, b_pad - B), (0, 0), (0, 0)))
        hproj = jnp.pad(hproj, ((0, b_pad - B), (0, 0)))

    vmem_limit = _vmem_limit_bytes(bt, S, H, enc.dtype.itemsize, cdt.itemsize,
                                   single_buffer_weights, vmem_cap)

    def build_and_run(weight_pipeline_mode):
        def wspec(shape, imap):
            if weight_pipeline_mode is None:
                return pl.BlockSpec(shape, imap)
            return pl.BlockSpec(shape, imap, pipeline_mode=weight_pipeline_mode)

        return pl.pallas_call(
            _attention_kernel,
            out_shape=jax.ShapeDtypeStruct((b_pad, H), out_dtype),
            grid_spec=pltpu.PrefetchScalarGridSpec(
                num_scalar_prefetch=0,
                grid=(nb,),
                in_specs=[
                    pl.BlockSpec((bt, 3 * H), lambda b: (b, 0)),      # hproj (f32)
                    pl.BlockSpec((bt, S, H), lambda b: (b, 0, 0)),    # encoder_outputs
                    wspec((H, 3 * H), lambda b: (0, 0)),              # W1 (encoder half)
                    wspec((3 * H, H), lambda b: (0, 0)),              # W4
                    wspec((1, H), lambda b: (0, 0)),                  # b4
                    wspec((1, 1, H), lambda b: (0, 0, 0)),            # to_weight row
                ],
                out_specs=pl.BlockSpec((bt, H), lambda b: (b, 0)),
            ),
            compiler_params=pltpu.CompilerParams(
                dimension_semantics=("parallel",),
                vmem_limit_bytes=vmem_limit),
        )(hproj, enc, w1a, w4, b4r, wt3)

    if single_buffer_weights:
        try:
            out = build_and_run(pl.Buffered(1))   # grid-invariant: single buffer
        except Exception:
            # Fallback if this Pallas build rejects buffer_count=1.
            out = build_and_run(None)
    else:
        out = build_and_run(None)
    return out[:B]


def init_params(key, hidden_size):
    """Deterministic init mirroring nn.Linear shapes (stored transposed: (in, out))."""
    H = hidden_size
    k1, k2, k3, k4, k5 = jax.random.split(key, 5)

    def unif(k, shape, fan_in):
        bound = 1.0 / (fan_in ** 0.5)
        return jax.random.uniform(k, shape, jnp.float32, -bound, bound)

    return {
        "w1t": unif(k1, (2 * H, 3 * H), 2 * H),   # linear1.weight^T
        "b1":  unif(k2, (1, 3 * H), 2 * H),       # linear1.bias
        "w4t": unif(k3, (3 * H, H), 3 * H),       # linear4.weight^T
        "b4":  unif(k4, (1, H), 3 * H),           # linear4.bias
        "wtt": unif(k5, (H, 1), H),               # to_weight.weight^T (no bias)
    }


def attention_ref(hidden_state, encoder_outputs, params):
    """Pure-JAX reference matching the PyTorch forward exactly."""
    B, S, H = encoder_outputs.shape
    hs = jnp.broadcast_to(hidden_state[:, None, :], (B, S, H))
    x = jnp.concatenate([encoder_outputs, hs], axis=2).reshape(-1, 2 * H)
    x = x @ params["w1t"] + params["b1"][0]
    x = x @ params["w4t"] + params["b4"][0]
    aw = (x @ params["wtt"]).reshape(B, S)
    aw = jax.nn.softmax(aw, axis=1)
    ctx = jnp.einsum("bs,bsh->bh", aw, encoder_outputs)
    return ctx


if __name__ == "__main__":
    key = jax.random.PRNGKey(0)
    # First config: baseline small shape; second: exercises the multi-row batch tile.
    for (B, S, H) in [(2, 8, 32), (4, 8, 32)]:
        kp, kh, ke, key = jax.random.split(key, 4)
        params = init_params(kp, H)
        hidden_state = jax.random.normal(kh, (B, H), jnp.float32)
        encoder_outputs = jax.random.normal(ke, (B, S, H), jnp.float32)

        ref = attention_ref(hidden_state, encoder_outputs, params)

        # f32 MXU path: tight check (Newton-refined softmax reciprocal).
        out_f32 = attention_forward(hidden_state, encoder_outputs, params,
                                    compute_dtype=jnp.float32)
        out_f32 = jax.block_until_ready(out_f32)
        assert out_f32.shape == (B, H)
        err32 = float(jnp.max(jnp.abs(out_f32 - ref)))
        assert jnp.allclose(out_f32, ref, atol=1e-3, rtol=1e-3), \
            f"f32 mismatch vs reference: {err32}"

        # Default bf16 MXU path (f32 accumulation): looser documented tolerance.
        out_bf16 = attention_forward(hidden_state, encoder_outputs, params)
        out_bf16 = jax.block_until_ready(out_bf16)
        assert out_bf16.shape == (B, H)
        err16 = float(jnp.max(jnp.abs(out_bf16 - ref)))
        assert jnp.allclose(out_bf16, ref, atol=5e-2, rtol=5e-2), \
            f"bf16 mismatch vs reference: {err16}"

    print("KERNEL_OK")
</pallas_src>

<mosaic_0001>
module attributes {stable_mosaic.version = 11 : i64} {
  func.func @_attention_kernel(%arg0: i32, %arg1: memref<2x96xf32, #tpu.memory_space<vmem>>, %arg2: memref<2x8x32xf32, #tpu.memory_space<vmem>>, %arg3: memref<32x96xf32, #tpu.memory_space<vmem>>, %arg4: memref<96x32xf32, #tpu.memory_space<vmem>>, %arg5: memref<1x32xf32, #tpu.memory_space<vmem>>, %arg6: memref<1x1x32xf32, #tpu.memory_space<vmem>>, %arg7: memref<2x32xf32, #tpu.memory_space<vmem>>) attributes {dimension_semantics = [#tpu.dimension_semantics<parallel>], iteration_bounds = array<i64: 1>, scalar_prefetch = 0 : i64, scratch_operands = 0 : i64, tpu.core_type = #tpu.core_type<tc>, window_params = [{transform_indices = @transform_0, window_bounds = array<i64: 2, 96>}, {transform_indices = @transform_1, window_bounds = array<i64: 2, 8, 32>}, {pipeline_mode = #tpu.pipeline_mode<synchronous>, transform_indices = @transform_2, window_bounds = array<i64: 32, 96>}, {pipeline_mode = #tpu.pipeline_mode<synchronous>, transform_indices = @transform_3, window_bounds = array<i64: 96, 32>}, {pipeline_mode = #tpu.pipeline_mode<synchronous>, transform_indices = @transform_4, window_bounds = array<i64: 1, 32>}, {pipeline_mode = #tpu.pipeline_mode<synchronous>, transform_indices = @transform_5, window_bounds = array<i64: 1, 1, 32>}, {transform_indices = @transform_6, window_bounds = array<i64: 2, 32>}]} {
    %c0 = arith.constant 0 : index
    %c0_0 = arith.constant 0 : index
    %c0_1 = arith.constant 0 : index
    %0 = vector.load %arg2[%c0, %c0_0, %c0_1] : memref<2x8x32xf32, #tpu.memory_space<vmem>>, vector<2x8x32xf32>
    %1 = vector.shape_cast %0 : vector<2x8x32xf32> to vector<16x32xf32>
    %c0_2 = arith.constant 0 : index
    %c0_3 = arith.constant 0 : index
    %2 = vector.load %arg3[%c0_2, %c0_3] : memref<32x96xf32, #tpu.memory_space<vmem>>, vector<32x96xf32>
    %cst = arith.constant dense<0.000000e+00> : vector<16x96xf32>
    %3 = tpu.matmul %1, %2, %cst {dimension_numbers = #tpu.dot_dimension_numbers<[1], [0], [0], [1], [0, 0, 1, 1], [], []>} : vector<16x32xf32>, vector<32x96xf32>, vector<16x96xf32> -> vector<16x96xf32>
    %4 = vector.shape_cast %3 : vector<16x96xf32> to vector<2x8x96xf32>
    %c0_4 = arith.constant 0 : index
    %c0_5 = arith.constant 0 : index
    %5 = vector.load %arg1[%c0_4, %c0_5] : memref<2x96xf32, #tpu.memory_space<vmem>>, vector<2x96xf32>
    %6 = vector.shape_cast %5 : vector<2x96xf32> to vector<2x1x96xf32>
    %7 = vector.broadcast %6 : vector<2x1x96xf32> to vector<2x8x96xf32>
    %8 = arith.addf %4, %7 : vector<2x8x96xf32>
    %9 = vector.shape_cast %8 : vector<2x8x96xf32> to vector<16x96xf32>
    %c0_6 = arith.constant 0 : index
    %c0_7 = arith.constant 0 : index
    %10 = vector.load %arg4[%c0_6, %c0_7] : memref<96x32xf32, #tpu.memory_space<vmem>>, vector<96x32xf32>
    %cst_8 = arith.constant dense<0.000000e+00> : vector<16x32xf32>
    %11 = tpu.matmul %9, %10, %cst_8 {dimension_numbers = #tpu.dot_dimension_numbers<[1], [0], [0], [1], [0, 0, 1, 1], [], []>} : vector<16x96xf32>, vector<96x32xf32>, vector<16x32xf32> -> vector<16x32xf32>
    %c0_9 = arith.constant 0 : index
    %c0_10 = arith.constant 0 : index
    %12 = vector.load %arg5[%c0_9, %c0_10] : memref<1x32xf32, #tpu.memory_space<vmem>>, vector<1x32xf32>
    %13 = vector.broadcast %12 : vector<1x32xf32> to vector<16x32xf32>
    %14 = arith.addf %11, %13 : vector<16x32xf32>
    %15 = vector.shape_cast %14 : vector<16x32xf32> to vector<2x8x32xf32>
    %c0_11 = arith.constant 0 : index
    %c0_12 = arith.constant 0 : index
    %c0_13 = arith.constant 0 : index
    %16 = vector.load %arg6[%c0_11, %c0_12, %c0_13] : memref<1x1x32xf32, #tpu.memory_space<vmem>>, vector<1x1x32xf32>
    %17 = vector.broadcast %16 : vector<1x1x32xf32> to vector<2x8x32xf32>
    %18 = arith.mulf %15, %17 : vector<2x8x32xf32>
    %cst_14 = arith.constant dense<0.000000e+00> : vector<2x8xf32>
    %19 = vector.multi_reduction <add>, %18, %cst_14 [2] : vector<2x8x32xf32> to vector<2x8xf32>
    %20 = vector.shape_cast %19 : vector<2x8xf32> to vector<2x8x1xf32>
    %cst_15 = arith.constant dense<0xFF800000> : vector<2x1xf32>
    %21 = vector.multi_reduction <maximumf>, %20, %cst_15 [1] : vector<2x8x1xf32> to vector<2x1xf32>
    %22 = vector.shape_cast %21 : vector<2x1xf32> to vector<2x1x1xf32>
    %23 = vector.broadcast %22 : vector<2x1x1xf32> to vector<2x8x1xf32>
    %24 = arith.subf %20, %23 : vector<2x8x1xf32>
    %25 = math.exp %24 : vector<2x8x1xf32>
    %cst_16 = arith.constant dense<0.000000e+00> : vector<2x1xf32>
    %26 = vector.multi_reduction <add>, %25, %cst_16 [1] : vector<2x8x1xf32> to vector<2x1xf32>
    %27 = vector.shape_cast %26 : vector<2x1xf32> to vector<2x1x1xf32>
    %28 = tpu.reciprocal %27 {approx = true} : vector<2x1x1xf32> -> vector<2x1x1xf32>
    %29 = arith.mulf %27, %28 : vector<2x1x1xf32>
    %cst_17 = arith.constant 2.000000e+00 : f32
    %30 = vector.broadcast %cst_17 : f32 to vector<2x1x1xf32>
    %31 = arith.subf %30, %29 : vector<2x1x1xf32>
    %32 = arith.mulf %28, %31 : vector<2x1x1xf32>
    %33 = vector.broadcast %32 : vector<2x1x1xf32> to vector<2x8x1xf32>
    %34 = arith.mulf %25, %33 : vector<2x8x1xf32>
    %35 = vector.broadcast %34 : vector<2x8x1xf32> to vector<2x8x32xf32>
    %36 = arith.mulf %35, %0 : vector<2x8x32xf32>
    %cst_18 = arith.constant dense<0.000000e+00> : vector<2x32xf32>
    %37 = vector.multi_reduction <add>, %36, %cst_18 [1] : vector<2x8x32xf32> to vector<2x32xf32>
    %c0_19 = arith.constant 0 : index
    %c0_20 = arith.constant 0 : index
    %38 = vector.load %arg7[%c0_19, %c0_20] : memref<2x32xf32, #tpu.memory_space<vmem>>, vector<2x32xf32>
    tpu.vector_store %arg7[%c0_19, %c0_20], %37 {strides = array<i32>} : memref<2x32xf32, #tpu.memory_space<vmem>>, vector<2x32xf32>,
    return
  }
  func.func @transform_0(%arg0: i32) -> (i32, i32) {
    %c0_i32 = arith.constant 0 : i32
    %c0_i32_0 = arith.constant 0 : i32
    return %arg0, %c0_i32 : i32, i32
  }
  func.func @transform_1(%arg0: i32) -> (i32, i32, i32) {
    %c0_i32 = arith.constant 0 : i32
    %c0_i32_0 = arith.constant 0 : i32
    %c0_i32_1 = arith.constant 0 : i32
    return %arg0, %c0_i32, %c0_i32_0 : i32, i32, i32
  }
  func.func @transform_2(%arg0: i32) -> (i32, i32) {
    %c0_i32 = arith.constant 0 : i32
    %c0_i32_0 = arith.constant 0 : i32
    %c0_i32_1 = arith.constant 0 : i32
    return %c0_i32, %c0_i32_0 : i32, i32
  }
  func.func @transform_3(%arg0: i32) -> (i32, i32) {
    %c0_i32 = arith.constant 0 : i32
    %c0_i32_0 = arith.constant 0 : i32
    %c0_i32_1 = arith.constant 0 : i32
    return %c0_i32, %c0_i32_0 : i32, i32
  }
  func.func @transform_4(%arg0: i32) -> (i32, i32) {
    %c0_i32 = arith.constant 0 : i32
    %c0_i32_0 = arith.constant 0 : i32
    %c0_i32_1 = arith.constant 0 : i32
    return %c0_i32, %c0_i32_0 : i32, i32
  }
  func.func @transform_5(%arg0: i32) -> (i32, i32, i32) {
    %c0_i32 = arith.constant 0 : i32
    %c0_i32_0 = arith.constant 0 : i32
    %c0_i32_1 = arith.constant 0 : i32
    %c0_i32_2 = arith.constant 0 : i32
    return %c0_i32, %c0_i32_0, %c0_i32_1 : i32, i32, i32
  }
  func.func @transform_6(%arg0: i32) -> (i32, i32) {
    %c0_i32 = arith.constant 0 : i32
    %c0_i32_0 = arith.constant 0 : i32
    return %arg0, %c0_i32 : i32, i32
  }
}

module attributes {stable_mosaic.version = 11 : i64} {
  func.func @_attention_kernel(%arg0: i32, %arg1: memref<2x96xf32, #tpu.memory_space<vmem>>, %arg2: memref<2x8x32xf32, #tpu.memory_space<vmem>>, %arg3: memref<32x96xf32, #tpu.memory_space<vmem>>, %arg4: memref<96x32xf32, #tpu.memory_space<vmem>>, %arg5: memref<1x32xf32, #tpu.memory_space<vmem>>, %arg6: memref<1x1x32xf32, #tpu.memory_space<vmem>>, %arg7: memref<2x32xf32, #tpu.memory_space<vmem>>) attributes {dimension_semantics = [#tpu.dimension_semantics<parallel>], iteration_bounds = array<i64: 1>, scalar_prefetch = 0 : i64, scratch_operands = 0 : i64, tpu.core_type = #tpu.core_type<tc>, window_params = [{transform_indices = @transform_0, window_bounds = array<i64: 2, 96>}, {transform_indices = @transform_1, window_bounds = array<i64: 2, 8, 32>}, {pipeline_mode = #tpu.pipeline_mode<synchronous>, transform_indices = @transform_2, window_bounds = array<i64: 32, 96>}, {pipeline_mode = #tpu.pipeline_mode<synchronous>, transform_indices = @transform_3, window_bounds = array<i64: 96, 32>}, {pipeline_mode = #tpu.pipeline_mode<synchronous>, transform_indices = @transform_4, window_bounds = array<i64: 1, 32>}, {pipeline_mode = #tpu.pipeline_mode<synchronous>, transform_indices = @transform_5, window_bounds = array<i64: 1, 1, 32>}, {transform_indices = @transform_6, window_bounds = array<i64: 2, 32>}]} {
    %c0 = arith.constant 0 : index
    %c0_0 = arith.constant 0 : index
    %c0_1 = arith.constant 0 : index
    %0 = vector.load %arg2[%c0, %c0_0, %c0_1] : memref<2x8x32xf32, #tpu.memory_space<vmem>>, vector<2x8x32xf32>
    %1 = vector.shape_cast %0 : vector<2x8x32xf32> to vector<16x32xf32>
    %c0_2 = arith.constant 0 : index
    %c0_3 = arith.constant 0 : index
    %2 = vector.load %arg3[%c0_2, %c0_3] : memref<32x96xf32, #tpu.memory_space<vmem>>, vector<32x96xf32>
    %cst = arith.constant dense<0.000000e+00> : vector<16x96xf32>
    %3 = tpu.matmul %1, %2, %cst {dimension_numbers = #tpu.dot_dimension_numbers<[1], [0], [0], [1], [0, 0, 1, 1], [], []>} : vector<16x32xf32>, vector<32x96xf32>, vector<16x96xf32> -> vector<16x96xf32>
    %4 = vector.shape_cast %3 : vector<16x96xf32> to vector<2x8x96xf32>
    %c0_4 = arith.constant 0 : index
    %c0_5 = arith.constant 0 : index
    %5 = vector.load %arg1[%c0_4, %c0_5] : memref<2x96xf32, #tpu.memory_space<vmem>>, vector<2x96xf32>
    %6 = vector.shape_cast %5 : vector<2x96xf32> to vector<2x1x96xf32>
    %7 = vector.broadcast %6 : vector<2x1x96xf32> to vector<2x8x96xf32>
    %8 = arith.addf %4, %7 : vector<2x8x96xf32>
    %9 = vector.shape_cast %8 : vector<2x8x96xf32> to vector<16x96xf32>
    %c0_6 = arith.constant 0 : index
    %c0_7 = arith.constant 0 : index
    %10 = vector.load %arg4[%c0_6, %c0_7] : memref<96x32xf32, #tpu.memory_space<vmem>>, vector<96x32xf32>
    %cst_8 = arith.constant dense<0.000000e+00> : vector<16x32xf32>
    %11 = tpu.matmul %9, %10, %cst_8 {dimension_numbers = #tpu.dot_dimension_numbers<[1], [0], [0], [1], [0, 0, 1, 1], [], []>} : vector<16x96xf32>, vector<96x32xf32>, vector<16x32xf32> -> vector<16x32xf32>
    %c0_9 = arith.constant 0 : index
    %c0_10 = arith.constant 0 : index
    %12 = vector.load %arg5[%c0_9, %c0_10] : memref<1x32xf32, #tpu.memory_space<vmem>>, vector<1x32xf32>
    %13 = vector.broadcast %12 : vector<1x32xf32> to vector<16x32xf32>
    %14 = arith.addf %11, %13 : vector<16x32xf32>
    %15 = vector.shape_cast %14 : vector<16x32xf32> to vector<2x8x32xf32>
    %c0_11 = arith.constant 0 : index
    %c0_12 = arith.constant 0 : index
    %c0_13 = arith.constant 0 : index
    %16 = vector.load %arg6[%c0_11, %c0_12, %c0_13] : memref<1x1x32xf32, #tpu.memory_space<vmem>>, vector<1x1x32xf32>
    %17 = vector.broadcast %16 : vector<1x1x32xf32> to vector<2x8x32xf32>
    %18 = arith.mulf %15, %17 : vector<2x8x32xf32>
    %cst_14 = arith.constant dense<0.000000e+00> : vector<2x8xf32>
    %19 = vector.multi_reduction <add>, %18, %cst_14 [2] : vector<2x8x32xf32> to vector<2x8xf32>
    %20 = vector.shape_cast %19 : vector<2x8xf32> to vector<2x8x1xf32>
    %cst_15 = arith.constant dense<0xFF800000> : vector<2x1xf32>
    %21 = vector.multi_reduction <maximumf>, %20, %cst_15 [1] : vector<2x8x1xf32> to vector<2x1xf32>
    %22 = vector.shape_cast %21 : vector<2x1xf32> to vector<2x1x1xf32>
    %23 = vector.broadcast %22 : vector<2x1x1xf32> to vector<2x8x1xf32>
    %24 = arith.subf %20, %23 : vector<2x8x1xf32>
    %25 = math.exp %24 : vector<2x8x1xf32>
    %cst_16 = arith.constant dense<0.000000e+00> : vector<2x1xf32>
    %26 = vector.multi_reduction <add>, %25, %cst_16 [1] : vector<2x8x1xf32> to vector<2x1xf32>
    %27 = vector.shape_cast %26 : vector<2x1xf32> to vector<2x1x1xf32>
    %28 = tpu.reciprocal %27 {approx = true} : vector<2x1x1xf32> -> vector<2x1x1xf32>
    %29 = arith.mulf %27, %28 : vector<2x1x1xf32>
    %cst_17 = arith.constant 2.000000e+00 : f32
    %30 = vector.broadcast %cst_17 : f32 to vector<2x1x1xf32>
    %31 = arith.subf %30, %29 : vector<2x1x1xf32>
    %32 = arith.mulf %28, %31 : vector<2x1x1xf32>
    %33 = vector.broadcast %32 : vector<2x1x1xf32> to vector<2x8x1xf32>
    %34 = arith.mulf %25, %33 : vector<2x8x1xf32>
    %35 = vector.broadcast %34 : vector<2x8x1xf32> to vector<2x8x32xf32>
    %36 = arith.mulf %35, %0 : vector<2x8x32xf32>
    %cst_18 = arith.constant dense<0.000000e+00> : vector<2x32xf32>
    %37 = vector.multi_reduction <add>, %36, %cst_18 [1] : vector<2x8x32xf32> to vector<2x32xf32>
    %c0_19 = arith.constant 0 : index
    %c0_20 = arith.constant 0 : index
    %38 = vector.load %arg7[%c0_19, %c0_20] : memref<2x32xf32, #tpu.memory_space<vmem>>, vector<2x32xf32>
    tpu.vector_store %arg7[%c0_19, %c0_20], %37 {strides = array<i32>} : memref<2x32xf32, #tpu.memory_space<vmem>>, vector<2x32xf32>,
    return
  }
  func.func @transform_0(%arg0: i32) -> (i32, i32) {
    %c0_i32 = arith.constant 0 : i32
    %c0_i32_0 = arith.constant 0 : i32
    return %arg0, %c0_i32 : i32, i32
  }
  func.func @transform_1(%arg0: i32) -> (i32, i32, i32) {
    %c0_i32 = arith.constant 0 : i32
    %c0_i32_0 = arith.constant 0 : i32
    %c0_i32_1 = arith.constant 0 : i32
    return %arg0, %c0_i32, %c0_i32_0 : i32, i32, i32
  }
  func.func @transform_2(%arg0: i32) -> (i32, i32) {
    %c0_i32 = arith.constant 0 : i32
    %c0_i32_0 = arith.constant 0 : i32
    %c0_i32_1 = arith.constant 0 : i32
    return %c0_i32, %c0_i32_0 : i32, i32
  }
  func.func @transform_3(%arg0: i32) -> (i32, i32) {
    %c0_i32 = arith.constant 0 : i32
    %c0_i32_0 = arith.constant 0 : i32
    %c0_i32_1 = arith.constant 0 : i32
    return %c0_i32, %c0_i32_0 : i32, i32
  }
  func.func @transform_4(%arg0: i32) -> (i32, i32) {
    %c0_i32 = arith.constant 0 : i32
    %c0_i32_0 = arith.constant 0 : i32
    %c0_i32_1 = arith.constant 0 : i32
    return %c0_i32, %c0_i32_0 : i32, i32
  }
  func.func @transform_5(%arg0: i32) -> (i32, i32, i32) {
    %c0_i32 = arith.constant 0 : i32
    %c0_i32_0 = arith.constant 0 : i32
    %c0_i32_1 = arith.constant 0 : i32
    %c0_i32_2 = arith.constant 0 : i32
    return %c0_i32, %c0_i32_0, %c0_i32_1 : i32, i32, i32
  }
  func.func @transform_6(%arg0: i32) -> (i32, i32) {
    %c0_i32 = arith.constant 0 : i32
    %c0_i32_0 = arith.constant 0 : i32
    return %arg0, %c0_i32 : i32, i32
  }
}

</mosaic_0001>

<llo_original>
// kernel: tpu_custom_call.1
$region0: #{tpu_custom_call.1}
  #allocation0 [shape = 'u32[]', space=smem, size = 0x4, offset = 0x4, fixed_abs, tag = 'smem constant byte address 0x4 - core index']
  #allocation1 [shape = 'u32[144,128]{1,0:T(1,128)}', space=vmem, size = 0x12000, scoped, tag = 'internal scratch']
  %s0 = inlined_call_operand.vmem [shape: f32[2,96], index: 0, kind: input, shape index: {}]
  %s1 = inlined_call_operand.vmem [shape: f32[2,8,32], index: 1, kind: input, shape index: {}]
  %s2 = inlined_call_operand.vmem [shape: f32[32,96], index: 2, kind: input, shape index: {}]
  %s3 = inlined_call_operand.vmem [shape: f32[96,32], index: 3, kind: input, shape index: {}]
  %s4 = inlined_call_operand.vmem [shape: f32[1,32], index: 4, kind: input, shape index: {}]
  %s5 = inlined_call_operand.vmem [shape: f32[1,1,32], index: 5, kind: input, shape index: {}]
  %s6 = inlined_call_operand.hbm [shape: f32[2,32], index: 6, kind: output, shape index: {}]
  %s7 = sld [smem:[#allocation0]]
  $region34: #{tpu_custom_call.1} parent=0
    _
  %s9 = ssub.s32 1, %s7
  %s10 = scalar_select 0, %s9, %s7
  $region1: #{tpu_custom_call.1} parent=0
    #allocation2 [shape = 'u8[1024]{0}', space=vmem, size = 0x400, scoped, tag = 'output window, operand 0, single buffered']
    #allocation3 [shape = 's32[1]{0}', space=sflag, size = 0x4, scoped, tag = 'scoped memory for tpu_custom_call.1']
    %11 = vsyncpa [#allocation3], 0
    // Predicated region
    $region2: #{tpu_custom_call.1} parent=1 // pred_check
      _
    $region3: #{tpu_custom_call.1} parent=1 // pred_check_branch
      %13 = sbr.rel (0) target = $region5
    $region4: #{tpu_custom_call.1} parent=1 // pred_region
      _
    $region5: #{tpu_custom_call.1} parent=1 // pred_fallthru
      _
    // Predicated region
    $region6: #{tpu_custom_call.1} parent=1 // pred_check
      _
    $region7: #{tpu_custom_call.1} parent=1 // pred_check_branch
      %15 = sbr.rel (0) target = $region9
    $region8: #{tpu_custom_call.1} parent=1 // pred_region
      _
    $region9: #{tpu_custom_call.1} parent=1 // pred_fallthru
      _
    // Predicated region
    $region10: #{tpu_custom_call.1} parent=1 // pred_check
      _
    $region11: #{tpu_custom_call.1} parent=1 // pred_check_branch
      %17 = sbr.rel (0) target = $region13
    $region12: #{tpu_custom_call.1} parent=1 // pred_region
      _
    $region13: #{tpu_custom_call.1} parent=1 // pred_fallthru
      _
    // Predicated region
    $region14: #{tpu_custom_call.1} parent=1 // pred_check
      _
    $region15: #{tpu_custom_call.1} parent=1 // pred_check_branch
      %19 = sbr.rel (0) target = $region17
    $region16: #{tpu_custom_call.1} parent=1 // pred_region
      _
    $region17: #{tpu_custom_call.1} parent=1 // pred_fallthru
      _
    // Predicated region
    $region18: #{tpu_custom_call.1} parent=1 // pred_check
      _
    $region19: #{tpu_custom_call.1} parent=1 // pred_check_branch
      %21 = sbr.rel (0) target = $region21
    $region20: #{tpu_custom_call.1} parent=1 // pred_region
      _
    $region21: #{tpu_custom_call.1} parent=1 // pred_fallthru
      _
    // Predicated region
    $region22: #{tpu_custom_call.1} parent=1 // pred_check
      _
    $region23: #{tpu_custom_call.1} parent=1 // pred_check_branch
      %23 = sbr.rel (0) target = $region25
    $region24: #{tpu_custom_call.1} parent=1 // pred_region
      _
    $region25: #{tpu_custom_call.1} parent=1 // pred_fallthru
      _
    %v24 = vld [vmem:[%s1] sm:$0xff]
    %v25 = vld [vmem:[%s1 + $0x8] sm:$0xff]
    %v26 = vld [vmem:[%s2] sm:$0xff]
    %v27 = vld [vmem:[%s2 + $0x8] sm:$0xff]
    %v28 = vld [vmem:[%s2 + $0x10] sm:$0xff]
    %v29 = vld [vmem:[%s2 + $0x18] sm:$0xff]
    %vm30 = vcmask 261120
    %v32 = vsel %vm30, %v24, 0
    %v35 = vsel %vm30, %v25, 0
    %37 = vmatprep.subr.mxu0 0.0
    %38 = vmatpush1.msra.mxu0 %v26
    %39 = vmatprep.subr.mxu0 0.0
    %40 = vmatpush1.msra.mxu0 %v27
    %41 = vmatprep.subr.mxu0 0.0
    %42 = vmatpush1.msra.mxu0 %v28
    %43 = vmatprep.subr.mxu0 0.0
    %44 = vmatpush1.msra.mxu0 %v29
    %45 = vmatprep.subr.mxu0 0.0
    %46 = vmatpush1.msra.mxu0 0.0
    %47 = vmatprep.subr.mxu0 0.0
    %48 = vmatpush1.msra.mxu0 0.0
    %49 = vmatprep.subr.mxu0 0.0
    %50 = vmatpush1.msra.mxu0 0.0
    %51 = vmatprep.subr.mxu0 0.0
    %52 = vmatpush1.msra.mxu0 0.0
    %53 = vmatprep.subr.mxu0 0.0
    %54 = vmatpush1.msra.mxu0 0.0
    %55 = vmatprep.subr.mxu0 0.0
    %56 = vmatpush1.msra.mxu0 0.0
    %57 = vmatprep.subr.mxu0 0.0
    %58 = vmatpush1.msra.mxu0 0.0
    %59 = vmatprep.subr.mxu0 0.0
    %60 = vmatpush1.msra.mxu0 0.0
    %61 = vmatprep.subr.mxu0 0.0
    %62 = vmatpush1.msra.mxu0 0.0
    %63 = vmatprep.subr.mxu0 0.0
    %64 = vmatpush1.msra.mxu0 0.0
    %65 = vmatprep.subr.mxu0 0.0
    %66 = vmatpush1.msra.mxu0 0.0
    %67 = vmatprep.subr.mxu0 0.0
    %68 = vmatpush1.msra.mxu0 0.0
    %69 = vmatprep.subr.mxu0 0.0
    %70 = vmatpush1.msra.mxu0 0.0
    %71 = vmatprep.subr.mxu0 0.0
    %72 = vmatpush1.msra.mxu0 0.0
    %73 = vmatprep.subr.mxu0 0.0
    %74 = vmatpush1.msra.mxu0 0.0
    %75 = vmatprep.subr.mxu0 0.0
    %76 = vmatpush1.msra.mxu0 0.0
    %77 = vmatprep.subr.mxu0 0.0
    %78 = vmatpush1.msra.mxu0 0.0
    %79 = vmatprep.subr.mxu0 0.0
    %80 = vmatpush1.msra.mxu0 0.0
    %81 = vmatprep.subr.mxu0 0.0
    %82 = vmatpush1.msra.mxu0 0.0
    %83 = vmatprep.subr.mxu0 0.0
    %84 = vmatpush1.msra.mxu0 0.0
    %85 = vmatprep.subr.mxu0 0.0
    %86 = vmatpush1.msra.mxu0 0.0
    %87 = vmatprep.subr.mxu0 0.0
    %88 = vmatpush1.msra.mxu0 0.0
    %89 = vmatprep.subr.mxu0 0.0
    %90 = vmatpush1.msra.mxu0 0.0
    %91 = vmatprep.subr.mxu0 0.0
    %92 = vmatpush1.msra.mxu0 0.0
    %93 = vmatprep.subr.mxu0 0.0
    %94 = vmatpush1.msra.mxu0 0.0
    %95 = vmatprep.subr.mxu0 0.0
    %96 = vmatpush1.msra.mxu0 0.0
    %97 = vmatprep.subr.mxu0 0.0
    %98 = vmatpush1.msra.mxu0 0.0
    %99 = vmatprep.subr.mxu0 0.0
    %100 = vmatpush1.msra.mxu0 0.0
    %101 = vmatprep.mubr.f32.mxu0 0.0
    %102 = vmatmul.mubr.f32.gmra.mrb[0].mxu0 %v32
    %v103 = vpop.f32.mrb[0].mxu0
    %v104 = vadd.f32 0.0, %v103
    %v105 = vpop.f32.mrb[0].mxu0
    %106 = vmatprep.mubr.f32.mxu0 0.0
    %107 = vmatmul.mubr.f32.gmra.mrb[0].mxu0 %v35
    %v108 = vpop.f32.mrb[0].mxu0
    %v109 = vadd.f32 0.0, %v108
    %v110 = vpop.f32.mrb[0].mxu0
    %111 = vdwg.mxu0
    %v112 = vld [vmem:[%s0] sm:$0x3]
    %v115 = vunpack.c.l.s4 1966171168
    %v116 = vunpack.c.0.s8 %v115
    %v117 = vlaneseq
    %v118 = vshrl.u32 %v117, 7
    %v119 = vsub.s32 %v116, %v118
    %v120 = vrot.slane %v112, %v119
    %v121 = vcombine.high %v120, %v120
    %v123 = vunpack.c.l.s4 1966171168
    %v124 = vunpack.c.0.s8 %v123
    %v125 = vlaneseq
    %v126 = vshrl.u32 %v125, 7
    %v127 = vsub.s32 %v124, %v126
    %v128 = vrot.slane %v120, %v127
    %v130 = vunpack.c.l.s4 1966171168
    %v131 = vunpack.c.0.s8 %v130
    %v132 = vlaneseq
    %v133 = vshrl.u32 %v132, 7
    %v134 = vsub.s32 %v131, %v133
    %v135 = vrot.slane %v121, %v134
    %v136 = vlaneseq
    %v137 = vshrl.u32 %v136, 7
    %v138 = vsub.s32 0, %v137
    %v139 = vrot.slane %v128, %v138
    %v140 = vlaneseq
    %v141 = vshrl.u32 %v140, 7
    %v142 = vsub.s32 0, %v141
    %v143 = vrot.slane %v135, %v142
    %v146 = vadd.f32 %v104, %v139
    %v147 = vadd.f32 %v109, %v143
    %v148 = vld [vmem:[%s3] sm:$0xff]
    %v149 = vld [vmem:[%s3 + $0x8] sm:$0xff]
    %v150 = vld [vmem:[%s3 + $0x10] sm:$0xff]
    %v151 = vld [vmem:[%s3 + $0x18] sm:$0xff]
    %v152 = vld [vmem:[%s3 + $0x20] sm:$0xff]
    %v153 = vld [vmem:[%s3 + $0x28] sm:$0xff]
    %v154 = vld [vmem:[%s3 + $0x30] sm:$0xff]
    %v155 = vld [vmem:[%s3 + $0x38] sm:$0xff]
    %v156 = vld [vmem:[%s3 + $0x40] sm:$0xff]
    %v157 = vld [vmem:[%s3 + $0x48] sm:$0xff]
    %v158 = vld [vmem:[%s3 + $0x50] sm:$0xff]
    %v159 = vld [vmem:[%s3 + $0x58] sm:$0xff]
    %v160 = vld [vmem:[%s4] sm:$0x1]
    %v162 = vlaneseq
    %v163 = vshrl.u32 %v162, 7
    %v164 = vsub.s32 0, %v163
    %v165 = vrot.slane %v160, %v164
    %vm167 = vcmask 785408
    %v169 = vsel %vm167, %v146, 0
    %v172 = vsel %vm167, %v147, 0
    %174 = vmatprep.subr.mxu0 0.0
    %175 = vmatpush1.msra.mxu0 %v148
    %176 = vmatprep.subr.mxu0 0.0
    %177 = vmatpush1.msra.mxu0 %v149
    %178 = vmatprep.subr.mxu0 0.0
    %179 = vmatpush1.msra.mxu0 %v150
    %180 = vmatprep.subr.mxu0 0.0
    %181 = vmatpush1.msra.mxu0 %v151
    %182 = vmatprep.subr.mxu0 0.0
    %183 = vmatpush1.msra.mxu0 %v152
    %184 = vmatprep.subr.mxu0 0.0
    %185 = vmatpush1.msra.mxu0 %v153
    %186 = vmatprep.subr.mxu0 0.0
    %187 = vmatpush1.msra.mxu0 %v154
    %188 = vmatprep.subr.mxu0 0.0
    %189 = vmatpush1.msra.mxu0 %v155
    %190 = vmatprep.subr.mxu0 0.0
    %191 = vmatpush1.msra.mxu0 %v156
    %192 = vmatprep.subr.mxu0 0.0
    %193 = vmatpush1.msra.mxu0 %v157
    %194 = vmatprep.subr.mxu0 0.0
    %195 = vmatpush1.msra.mxu0 %v158
    %196 = vmatprep.subr.mxu0 0.0
    %197 = vmatpush1.msra.mxu0 %v159
    %198 = vmatprep.subr.mxu0 0.0
    %199 = vmatpush1.msra.mxu0 0.0
    %200 = vmatprep.subr.mxu0 0.0
    %201 = vmatpush1.msra.mxu0 0.0
    %202 = vmatprep.subr.mxu0 0.0
    %203 = vmatpush1.msra.mxu0 0.0
    %204 = vmatprep.subr.mxu0 0.0
    %205 = vmatpush1.msra.mxu0 0.0
    %206 = vmatprep.subr.mxu0 0.0
    %207 = vmatpush1.msra.mxu0 0.0
    %208 = vmatprep.subr.mxu0 0.0
    %209 = vmatpush1.msra.mxu0 0.0
    %210 = vmatprep.subr.mxu0 0.0
    %211 = vmatpush1.msra.mxu0 0.0
    %212 = vmatprep.subr.mxu0 0.0
    %213 = vmatpush1.msra.mxu0 0.0
    %214 = vmatprep.subr.mxu0 0.0
    %215 = vmatpush1.msra.mxu0 0.0
    %216 = vmatprep.subr.mxu0 0.0
    %217 = vmatpush1.msra.mxu0 0.0
    %218 = vmatprep.subr.mxu0 0.0
    %219 = vmatpush1.msra.mxu0 0.0
    %220 = vmatprep.subr.mxu0 0.0
    %221 = vmatpush1.msra.mxu0 0.0
    %222 = vmatprep.subr.mxu0 0.0
    %223 = vmatpush1.msra.mxu0 0.0
    %224 = vmatprep.subr.mxu0 0.0
    %225 = vmatpush1.msra.mxu0 0.0
    %226 = vmatprep.subr.mxu0 0.0
    %227 = vmatpush1.msra.mxu0 0.0
    %228 = vmatprep.subr.mxu0 0.0
    %229 = vmatpush1.msra.mxu0 0.0
    %230 = vmatprep.subr.mxu0 0.0
    %231 = vmatpush1.msra.mxu0 0.0
    %232 = vmatprep.subr.mxu0 0.0
    %233 = vmatpush1.msra.mxu0 0.0
    %234 = vmatprep.subr.mxu0 0.0
    %235 = vmatpush1.msra.mxu0 0.0
    %236 = vmatprep.subr.mxu0 0.0
    %237 = vmatpush1.msra.mxu0 0.0
    %238 = vmatprep.mubr.f32.mxu0 0.0
    %239 = vmatmul.mubr.f32.gmra.mrb[0].mxu0 %v169
    %v240 = vpop.f32.mrb[0].mxu0
    %v241 = vadd.f32 %v165, %v240
    %v242 = vpop.f32.mrb[0].mxu0
    %243 = vmatprep.mubr.f32.mxu0 0.0
    %244 = vmatmul.mubr.f32.gmra.mrb[0].mxu0 %v172
    %v245 = vpop.f32.mrb[0].mxu0
    %v246 = vadd.f32 %v165, %v245
    %v247 = vpop.f32.mrb[0].mxu0
    %248 = vdwg.mxu0
    %v249 = vld [vmem:[%s5] sm:$0x1]
    %v251 = vlaneseq
    %v252 = vshrl.u32 %v251, 7
    %v253 = vsub.s32 0, %v252
    %v254 = vrot.slane %v249, %v253
    %v256 = vmul.f32 %v241, %v254
    %v257 = vmul.f32 %v246, %v254
    %v258 = vsel %vm30, %v256, 0.0
    %259 = vadd.xlane.f32.xlu0 %v258
    %v260 = vpop.xlane.xlu0 %259
    %v261 = vsel %vm30, %v257, 0.0
    %262 = vadd.xlane.f32.xlu0 %v261
    %v263 = vpop.xlane.xlu0 %262
    %v264 = vrot.slane %v260, 4
    %v265 = vmax.f32 %v260, %v264
    %v266 = vrot.slane %v265, 2
    %v267 = vmax.f32 %v265, %v266
    %v268 = vrot.slane %v267, 1
    %v269 = vmax.f32 %v267, %v268
    %v270 = vrot.slane %v263, 4
    %v271 = vmax.f32 %v263, %v270
    %v272 = vrot.slane %v271, 2
    %v273 = vmax.f32 %v271, %v272
    %v274 = vrot.slane %v273, 1
    %v275 = vmax.f32 %v273, %v274
    %v276 = vsub.f32 %v260, %v269
    %v277 = vsub.f32 %v263, %v275
    %v278 = vmul.f32 %v276, 1.442695
    %v279 = vpow.pop %v278
    %v280 = vmul.f32 %v277, 1.442695
    %v281 = vpow.pop %v280
    %v282 = vrot.slane %v279, 4
    %v283 = vadd.f32 %v279, %v282
    %v284 = vrot.slane %v283, 2
    %v285 = vadd.f32 %v283, %v284
    %v286 = vrot.slane %v285, 1
    %v287 = vadd.f32 %v285, %v286
    %v288 = vrot.slane %v281, 4
    %v289 = vadd.f32 %v281, %v288
    %v290 = vrot.slane %v289, 2
    %v291 = vadd.f32 %v289, %v290
    %v292 = vrot.slane %v291, 1
    %v293 = vadd.f32 %v291, %v292
    %v294 = vrcp.pop %v287
    %v295 = vrcp.pop %v293
    %v296 = vmul.f32 %v287, %v294
    %v297 = vmul.f32 %v293, %v295
    %v298 = vsub.f32 2.0, %v296
    %v299 = vsub.f32 2.0, %v297
    %v300 = vmul.f32 %v294, %v298
    %v301 = vmul.f32 %v295, %v299
    %v302 = vmul.f32 %v279, %v300
    %v303 = vmul.f32 %v281, %v301
    %v304 = vmul.f32 %v302, %v24
    %v305 = vmul.f32 %v303, %v25
    %v306 = vsel %vm30, %v304, 0.0
    %v307 = vrot.slane %v306, 4
    %v308 = vadd.f32 %v306, %v307
    %v309 = vrot.slane %v308, 2
    %v310 = vadd.f32 %v308, %v309
    %v311 = vrot.slane %v310, 1
    %v312 = vadd.f32 %v310, %v311
    %v313 = vsel %vm30, %v305, 0.0
    %v314 = vrot.slane %v313, 4
    %v315 = vadd.f32 %v313, %v314
    %v316 = vrot.slane %v315, 2
    %v317 = vadd.f32 %v315, %v316
    %v318 = vrot.slane %v317, 1
    %v319 = vadd.f32 %v317, %v318
    %vm322 = vcmask 1041409
    %v323 = vsel %vm322, %v319, %v312
    %vm325 = vcmask 254976
    %326 = vst.msk [vmem:[#allocation2] sm:$0x3] %vm325, %v323
    // Predicated region
    $region26: #{tpu_custom_call.1} parent=1 // pred_check
      _
    $region27: #{tpu_custom_call.1} parent=1 // pred_check_branch
      %328 = sbr.rel (0) target = $region29
    $region28: #{tpu_custom_call.1} parent=1 // pred_region
      %s330 = ssub.s32 32, 32
      %331 = vsyncadd [#allocation3], %s330
      %s333 = sshll.u32 [#allocation2], 4
      %s334 = int_to_ptr.vmem [resolvable:$true] %s333
      %336 = dma.vmem_to_hbm [thread:$0]  %s334, 32, %s6, [#allocation3]
    $region29: #{tpu_custom_call.1} parent=1 // pred_fallthru
      _
    // Predicated region
    $region30: #{tpu_custom_call.1} parent=1 // pred_check
      _
    $region31: #{tpu_custom_call.1} parent=1 // pred_check_branch
      %338 = sbr.rel (0) target = $region33
    $region32: #{tpu_custom_call.1} parent=1 // pred_region
      %339 = dma.done [#allocation3], 32
    $region33: #{tpu_custom_call.1} parent=1 // pred_fallthru
      _
    %340 = vsyncpa [#allocation3], 1

// kernel: tpu_custom_call.1
$region0: #{tpu_custom_call.1}
  #allocation0 [shape = 'u32[]', space=smem, size = 0x4, offset = 0x4, fixed_abs, tag = 'smem constant byte address 0x4 - core index']
  #allocation1 [shape = 'u32[144,128]{1,0:T(1,128)}', space=vmem, size = 0x12000, scoped, tag = 'internal scratch']
  %s0 = inlined_call_operand.vmem [shape: f32[2,96], index: 0, kind: input, shape index: {}]
  %s1 = inlined_call_operand.vmem [shape: f32[2,8,32], index: 1, kind: input, shape index: {}]
  %s2 = inlined_call_operand.vmem [shape: f32[32,96], index: 2, kind: input, shape index: {}]
  %s3 = inlined_call_operand.vmem [shape: f32[96,32], index: 3, kind: input, shape index: {}]
  %s4 = inlined_call_operand.vmem [shape: f32[1,32], index: 4, kind: input, shape index: {}]
  %s5 = inlined_call_operand.vmem [shape: f32[1,1,32], index: 5, kind: input, shape index: {}]
  %s6 = inlined_call_operand.hbm [shape: f32[2,32], index: 6, kind: output, shape index: {}]
  %s7 = sld [smem:[#allocation0]]
  $region34: #{tpu_custom_call.1} parent=0
    _
  %s9 = ssub.s32 1, %s7
  %s10 = scalar_select 0, %s9, %s7
  $region1: #{tpu_custom_call.1} parent=0
    #allocation2 [shape = 'u8[1024]{0}', space=vmem, size = 0x400, scoped, tag = 'output window, operand 0, single buffered']
    #allocation3 [shape = 's32[1]{0}', space=sflag, size = 0x4, scoped, tag = 'scoped memory for tpu_custom_call.1']
    %11 = vsyncpa [#allocation3], 0
    // Predicated region
    $region2: #{tpu_custom_call.1} parent=1 // pred_check
      _
    $region3: #{tpu_custom_call.1} parent=1 // pred_check_branch
      %13 = sbr.rel (0) target = $region5
    $region4: #{tpu_custom_call.1} parent=1 // pred_region
      _
    $region5: #{tpu_custom_call.1} parent=1 // pred_fallthru
      _
    // Predicated region
    $region6: #{tpu_custom_call.1} parent=1 // pred_check
      _
    $region7: #{tpu_custom_call.1} parent=1 // pred_check_branch
      %15 = sbr.rel (0) target = $region9
    $region8: #{tpu_custom_call.1} parent=1 // pred_region
      _
    $region9: #{tpu_custom_call.1} parent=1 // pred_fallthru
      _
    // Predicated region
    $region10: #{tpu_custom_call.1} parent=1 // pred_check
      _
    $region11: #{tpu_custom_call.1} parent=1 // pred_check_branch
      %17 = sbr.rel (0) target = $region13
    $region12: #{tpu_custom_call.1} parent=1 // pred_region
      _
    $region13: #{tpu_custom_call.1} parent=1 // pred_fallthru
      _
    // Predicated region
    $region14: #{tpu_custom_call.1} parent=1 // pred_check
      _
    $region15: #{tpu_custom_call.1} parent=1 // pred_check_branch
      %19 = sbr.rel (0) target = $region17
    $region16: #{tpu_custom_call.1} parent=1 // pred_region
      _
    $region17: #{tpu_custom_call.1} parent=1 // pred_fallthru
      _
    // Predicated region
    $region18: #{tpu_custom_call.1} parent=1 // pred_check
      _
    $region19: #{tpu_custom_call.1} parent=1 // pred_check_branch
      %21 = sbr.rel (0) target = $region21
    $region20: #{tpu_custom_call.1} parent=1 // pred_region
      _
    $region21: #{tpu_custom_call.1} parent=1 // pred_fallthru
      _
    // Predicated region
    $region22: #{tpu_custom_call.1} parent=1 // pred_check
      _
    $region23: #{tpu_custom_call.1} parent=1 // pred_check_branch
      %23 = sbr.rel (0) target = $region25
    $region24: #{tpu_custom_call.1} parent=1 // pred_region
      _
    $region25: #{tpu_custom_call.1} parent=1 // pred_fallthru
      _
    %v24 = vld [vmem:[%s1] sm:$0xff]
    %v25 = vld [vmem:[%s1 + $0x8] sm:$0xff]
    %v26 = vld [vmem:[%s2] sm:$0xff]
    %v27 = vld [vmem:[%s2 + $0x8] sm:$0xff]
    %v28 = vld [vmem:[%s2 + $0x10] sm:$0xff]
    %v29 = vld [vmem:[%s2 + $0x18] sm:$0xff]
    %vm30 = vcmask 261120
    %v32 = vsel %vm30, %v24, 0
    %v35 = vsel %vm30, %v25, 0
    %37 = vmatprep.subr.mxu0 0.0
    %38 = vmatpush1.msra.mxu0 %v26
    %39 = vmatprep.subr.mxu0 0.0
    %40 = vmatpush1.msra.mxu0 %v27
    %41 = vmatprep.subr.mxu0 0.0
    %42 = vmatpush1.msra.mxu0 %v28
    %43 = vmatprep.subr.mxu0 0.0
    %44 = vmatpush1.msra.mxu0 %v29
    %45 = vmatprep.subr.mxu0 0.0
    %46 = vmatpush1.msra.mxu0 0.0
    %47 = vmatprep.subr.mxu0 0.0
    %48 = vmatpush1.msra.mxu0 0.0
    %49 = vmatprep.subr.mxu0 0.0
    %50 = vmatpush1.msra.mxu0 0.0
    %51 = vmatprep.subr.mxu0 0.0
    %52 = vmatpush1.msra.mxu0 0.0
    %53 = vmatprep.subr.mxu0 0.0
    %54 = vmatpush1.msra.mxu0 0.0
    %55 = vmatprep.subr.mxu0 0.0
    %56 = vmatpush1.msra.mxu0 0.0
    %57 = vmatprep.subr.mxu0 0.0
    %58 = vmatpush1.msra.mxu0 0.0
    %59 = vmatprep.subr.mxu0 0.0
    %60 = vmatpush1.msra.mxu0 0.0
    %61 = vmatprep.subr.mxu0 0.0
    %62 = vmatpush1.msra.mxu0 0.0
    %63 = vmatprep.subr.mxu0 0.0
    %64 = vmatpush1.msra.mxu0 0.0
    %65 = vmatprep.subr.mxu0 0.0
    %66 = vmatpush1.msra.mxu0 0.0
    %67 = vmatprep.subr.mxu0 0.0
    %68 = vmatpush1.msra.mxu0 0.0
    %69 = vmatprep.subr.mxu0 0.0
    %70 = vmatpush1.msra.mxu0 0.0
    %71 = vmatprep.subr.mxu0 0.0
    %72 = vmatpush1.msra.mxu0 0.0
    %73 = vmatprep.subr.mxu0 0.0
    %74 = vmatpush1.msra.mxu0 0.0
    %75 = vmatprep.subr.mxu0 0.0
    %76 = vmatpush1.msra.mxu0 0.0
    %77 = vmatprep.subr.mxu0 0.0
    %78 = vmatpush1.msra.mxu0 0.0
    %79 = vmatprep.subr.mxu0 0.0
    %80 = vmatpush1.msra.mxu0 0.0
    %81 = vmatprep.subr.mxu0 0.0
    %82 = vmatpush1.msra.mxu0 0.0
    %83 = vmatprep.subr.mxu0 0.0
    %84 = vmatpush1.msra.mxu0 0.0
    %85 = vmatprep.subr.mxu0 0.0
    %86 = vmatpush1.msra.mxu0 0.0
    %87 = vmatprep.subr.mxu0 0.0
    %88 = vmatpush1.msra.mxu0 0.0
    %89 = vmatprep.subr.mxu0 0.0
    %90 = vmatpush1.msra.mxu0 0.0
    %91 = vmatprep.subr.mxu0 0.0
    %92 = vmatpush1.msra.mxu0 0.0
    %93 = vmatprep.subr.mxu0 0.0
    %94 = vmatpush1.msra.mxu0 0.0
    %95 = vmatprep.subr.mxu0 0.0
    %96 = vmatpush1.msra.mxu0 0.0
    %97 = vmatprep.subr.mxu0 0.0
    %98 = vmatpush1.msra.mxu0 0.0
    %99 = vmatprep.subr.mxu0 0.0
    %100 = vmatpush1.msra.mxu0 0.0
    %101 = vmatprep.mubr.f32.mxu0 0.0
    %102 = vmatmul.mubr.f32.gmra.mrb[0].mxu0 %v32
    %v103 = vpop.f32.mrb[0].mxu0
    %v104 = vadd.f32 0.0, %v103
    %v105 = vpop.f32.mrb[0].mxu0
    %106 = vmatprep.mubr.f32.mxu0 0.0
    %107 = vmatmul.mubr.f32.gmra.mrb[0].mxu0 %v35
    %v108 = vpop.f32.mrb[0].mxu0
    %v109 = vadd.f32 0.0, %v108
    %v110 = vpop.f32.mrb[0].mxu0
    %111 = vdwg.mxu0
    %v112 = vld [vmem:[%s0] sm:$0x3]
    %v115 = vunpack.c.l.s4 1966171168
    %v116 = vunpack.c.0.s8 %v115
    %v117 = vlaneseq
    %v118 = vshrl.u32 %v117, 7
    %v119 = vsub.s32 %v116, %v118
    %v120 = vrot.slane %v112, %v119
    %v121 = vcombine.high %v120, %v120
    %v123 = vunpack.c.l.s4 1966171168
    %v124 = vunpack.c.0.s8 %v123
    %v125 = vlaneseq
    %v126 = vshrl.u32 %v125, 7
    %v127 = vsub.s32 %v124, %v126
    %v128 = vrot.slane %v120, %v127
    %v130 = vunpack.c.l.s4 1966171168
    %v131 = vunpack.c.0.s8 %v130
    %v132 = vlaneseq
    %v133 = vshrl.u32 %v132, 7
    %v134 = vsub.s32 %v131, %v133
    %v135 = vrot.slane %v121, %v134
    %v136 = vlaneseq
    %v137 = vshrl.u32 %v136, 7
    %v138 = vsub.s32 0, %v137
    %v139 = vrot.slane %v128, %v138
    %v140 = vlaneseq
    %v141 = vshrl.u32 %v140, 7
    %v142 = vsub.s32 0, %v141
    %v143 = vrot.slane %v135, %v142
    %v146 = vadd.f32 %v104, %v139
    %v147 = vadd.f32 %v109, %v143
    %v148 = vld [vmem:[%s3] sm:$0xff]
    %v149 = vld [vmem:[%s3 + $0x8] sm:$0xff]
    %v150 = vld [vmem:[%s3 + $0x10] sm:$0xff]
    %v151 = vld [vmem:[%s3 + $0x18] sm:$0xff]
    %v152 = vld [vmem:[%s3 + $0x20] sm:$0xff]
    %v153 = vld [vmem:[%s3 + $0x28] sm:$0xff]
    %v154 = vld [vmem:[%s3 + $0x30] sm:$0xff]
    %v155 = vld [vmem:[%s3 + $0x38] sm:$0xff]
    %v156 = vld [vmem:[%s3 + $0x40] sm:$0xff]
    %v157 = vld [vmem:[%s3 + $0x48] sm:$0xff]
    %v158 = vld [vmem:[%s3 + $0x50] sm:$0xff]
    %v159 = vld [vmem:[%s3 + $0x58] sm:$0xff]
    %v160 = vld [vmem:[%s4] sm:$0x1]
    %v162 = vlaneseq
    %v163 = vshrl.u32 %v162, 7
    %v164 = vsub.s32 0, %v163
    %v165 = vrot.slane %v160, %v164
    %vm167 = vcmask 785408
    %v169 = vsel %vm167, %v146, 0
    %v172 = vsel %vm167, %v147, 0
    %174 = vmatprep.subr.mxu0 0.0
    %175 = vmatpush1.msra.mxu0 %v148
    %176 = vmatprep.subr.mxu0 0.0
    %177 = vmatpush1.msra.mxu0 %v149
    %178 = vmatprep.subr.mxu0 0.0
    %179 = vmatpush1.msra.mxu0 %v150
    %180 = vmatprep.subr.mxu0 0.0
    %181 = vmatpush1.msra.mxu0 %v151
    %182 = vmatprep.subr.mxu0 0.0
    %183 = vmatpush1.msra.mxu0 %v152
    %184 = vmatprep.subr.mxu0 0.0
    %185 = vmatpush1.msra.mxu0 %v153
    %186 = vmatprep.subr.mxu0 0.0
    %187 = vmatpush1.msra.mxu0 %v154
    %188 = vmatprep.subr.mxu0 0.0
    %189 = vmatpush1.msra.mxu0 %v155
    %190 = vmatprep.subr.mxu0 0.0
    %191 = vmatpush1.msra.mxu0 %v156
    %192 = vmatprep.subr.mxu0 0.0
    %193 = vmatpush1.msra.mxu0 %v157
    %194 = vmatprep.subr.mxu0 0.0
    %195 = vmatpush1.msra.mxu0 %v158
    %196 = vmatprep.subr.mxu0 0.0
    %197 = vmatpush1.msra.mxu0 %v159
    %198 = vmatprep.subr.mxu0 0.0
    %199 = vmatpush1.msra.mxu0 0.0
    %200 = vmatprep.subr.mxu0 0.0
    %201 = vmatpush1.msra.mxu0 0.0
    %202 = vmatprep.subr.mxu0 0.0
    %203 = vmatpush1.msra.mxu0 0.0
    %204 = vmatprep.subr.mxu0 0.0
    %205 = vmatpush1.msra.mxu0 0.0
    %206 = vmatprep.subr.mxu0 0.0
    %207 = vmatpush1.msra.mxu0 0.0
    %208 = vmatprep.subr.mxu0 0.0
    %209 = vmatpush1.msra.mxu0 0.0
    %210 = vmatprep.subr.mxu0 0.0
    %211 = vmatpush1.msra.mxu0 0.0
    %212 = vmatprep.subr.mxu0 0.0
    %213 = vmatpush1.msra.mxu0 0.0
    %214 = vmatprep.subr.mxu0 0.0
    %215 = vmatpush1.msra.mxu0 0.0
    %216 = vmatprep.subr.mxu0 0.0
    %217 = vmatpush1.msra.mxu0 0.0
    %218 = vmatprep.subr.mxu0 0.0
    %219 = vmatpush1.msra.mxu0 0.0
    %220 = vmatprep.subr.mxu0 0.0
    %221 = vmatpush1.msra.mxu0 0.0
    %222 = vmatprep.subr.mxu0 0.0
    %223 = vmatpush1.msra.mxu0 0.0
    %224 = vmatprep.subr.mxu0 0.0
    %225 = vmatpush1.msra.mxu0 0.0
    %226 = vmatprep.subr.mxu0 0.0
    %227 = vmatpush1.msra.mxu0 0.0
    %228 = vmatprep.subr.mxu0 0.0
    %229 = vmatpush1.msra.mxu0 0.0
    %230 = vmatprep.subr.mxu0 0.0
    %231 = vmatpush1.msra.mxu0 0.0
    %232 = vmatprep.subr.mxu0 0.0
    %233 = vmatpush1.msra.mxu0 0.0
    %234 = vmatprep.subr.mxu0 0.0
    %235 = vmatpush1.msra.mxu0 0.0
    %236 = vmatprep.subr.mxu0 0.0
    %237 = vmatpush1.msra.mxu0 0.0
    %238 = vmatprep.mubr.f32.mxu0 0.0
    %239 = vmatmul.mubr.f32.gmra.mrb[0].mxu0 %v169
    %v240 = vpop.f32.mrb[0].mxu0
    %v241 = vadd.f32 %v165, %v240
    %v242 = vpop.f32.mrb[0].mxu0
    %243 = vmatprep.mubr.f32.mxu0 0.0
    %244 = vmatmul.mubr.f32.gmra.mrb[0].mxu0 %v172
    %v245 = vpop.f32.mrb[0].mxu0
    %v246 = vadd.f32 %v165, %v245
    %v247 = vpop.f32.mrb[0].mxu0
    %248 = vdwg.mxu0
    %v249 = vld [vmem:[%s5] sm:$0x1]
    %v251 = vlaneseq
    %v252 = vshrl.u32 %v251, 7
    %v253 = vsub.s32 0, %v252
    %v254 = vrot.slane %v249, %v253
    %v256 = vmul.f32 %v241, %v254
    %v257 = vmul.f32 %v246, %v254
    %v258 = vsel %vm30, %v256, 0.0
    %259 = vadd.xlane.f32.xlu0 %v258
    %v260 = vpop.xlane.xlu0 %259
    %v261 = vsel %vm30, %v257, 0.0
    %262 = vadd.xlane.f32.xlu0 %v261
    %v263 = vpop.xlane.xlu0 %262
    %v264 = vrot.slane %v260, 4
    %v265 = vmax.f32 %v260, %v264
    %v266 = vrot.slane %v265, 2
    %v267 = vmax.f32 %v265, %v266
    %v268 = vrot.slane %v267, 1
    %v269 = vmax.f32 %v267, %v268
    %v270 = vrot.slane %v263, 4
    %v271 = vmax.f32 %v263, %v270
    %v272 = vrot.slane %v271, 2
    %v273 = vmax.f32 %v271, %v272
    %v274 = vrot.slane %v273, 1
    %v275 = vmax.f32 %v273, %v274
    %v276 = vsub.f32 %v260, %v269
    %v277 = vsub.f32 %v263, %v275
    %v278 = vmul.f32 %v276, 1.442695
    %v279 = vpow.pop %v278
    %v280 = vmul.f32 %v277, 1.442695
    %v281 = vpow.pop %v280
    %v282 = vrot.slane %v279, 4
    %v283 = vadd.f32 %v279, %v282
    %v284 = vrot.slane %v283, 2
    %v285 = vadd.f32 %v283, %v284
    %v286 = vrot.slane %v285, 1
    %v287 = vadd.f32 %v285, %v286
    %v288 = vrot.slane %v281, 4
    %v289 = vadd.f32 %v281, %v288
    %v290 = vrot.slane %v289, 2
    %v291 = vadd.f32 %v289, %v290
    %v292 = vrot.slane %v291, 1
    %v293 = vadd.f32 %v291, %v292
    %v294 = vrcp.pop %v287
    %v295 = vrcp.pop %v293
    %v296 = vmul.f32 %v287, %v294
    %v297 = vmul.f32 %v293, %v295
    %v298 = vsub.f32 2.0, %v296
    %v299 = vsub.f32 2.0, %v297
    %v300 = vmul.f32 %v294, %v298
    %v301 = vmul.f32 %v295, %v299
    %v302 = vmul.f32 %v279, %v300
    %v303 = vmul.f32 %v281, %v301
    %v304 = vmul.f32 %v302, %v24
    %v305 = vmul.f32 %v303, %v25
    %v306 = vsel %vm30, %v304, 0.0
    %v307 = vrot.slane %v306, 4
    %v308 = vadd.f32 %v306, %v307
    %v309 = vrot.slane %v308, 2
    %v310 = vadd.f32 %v308, %v309
    %v311 = vrot.slane %v310, 1
    %v312 = vadd.f32 %v310, %v311
    %v313 = vsel %vm30, %v305, 0.0
    %v314 = vrot.slane %v313, 4
    %v315 = vadd.f32 %v313, %v314
    %v316 = vrot.slane %v315, 2
    %v317 = vadd.f32 %v315, %v316
    %v318 = vrot.slane %v317, 1
    %v319 = vadd.f32 %v317, %v318
    %vm322 = vcmask 1041409
    %v323 = vsel %vm322, %v319, %v312
    %vm325 = vcmask 254976
    %326 = vst.msk [vmem:[#allocation2] sm:$0x3] %vm325, %v323
    // Predicated region
    $region26: #{tpu_custom_call.1} parent=1 // pred_check
      _
    $region27: #{tpu_custom_call.1} parent=1 // pred_check_branch
      %328 = sbr.rel (0) target = $region29
    $region28: #{tpu_custom_call.1} parent=1 // pred_region
      %s330 = ssub.s32 32, 32
      %331 = vsyncadd [#allocation3], %s330
      %s333 = sshll.u32 [#allocation2], 4
      %s334 = int_to_ptr.vmem [resolvable:$true] %s333
      %336 = dma.vmem_to_hbm [thread:$0]  %s334, 32, %s6, [#allocation3]
    $region29: #{tpu_custom_call.1} parent=1 // pred_fallthru
      _
    // Predicated region
    $region30: #{tpu_custom_call.1} parent=1 // pred_check
      _
    $region31: #{tpu_custom_call.1} parent=1 // pred_check_branch
      %338 = sbr.rel (0) target = $region33
    $region32: #{tpu_custom_call.1} parent=1 // pred_region
      %339 = dma.done [#allocation3], 32
    $region33: #{tpu_custom_call.1} parent=1 // pred_fallthru
      _
    %340 = vsyncpa [#allocation3], 1

</llo_original>
